<compile_context>
chip_gen: v5e
topology: v5e:2x2
jax: 0.10.0
libtpu: 0.0.40
codegen_flags: <defaults>
</compile_context>

<pallas_src>
from functools import partial

import jax
import jax.numpy as jnp
from jax.experimental import pallas as pl
from jax.experimental.pallas import tpu as pltpu


# ----------------------------- Pallas kernel ---------------------------------

def noise_gen_kernel(x_ref, eps_mean_ref, w1_ref, b1_ref, w2_ref, b2_ref, out_ref,
                     *, kappa_count, out_dim):
    x = x_ref[...]                                                    # (TB, D) f32

    # fc1 + ReLU (MXU, f32 accumulation; operands may be bf16 on v6e/v7x)
    h = jnp.dot(x.astype(w1_ref.dtype), w1_ref[...],
                preferred_element_type=jnp.float32) + b1_ref[...]
    h = jnp.maximum(h, 0.0)                                           # (TB, H) f32

    # fused fc21|fc22 -> [mu | log_var] in a single MXU issue
    mu_lv = jnp.dot(h.astype(w2_ref.dtype), w2_ref[...],
                    preferred_element_type=jnp.float32) + b2_ref[...]  # (TB, 2D) f32
    mu = mu_lv[:, :out_dim]
    log_var = mu_lv[:, out_dim:]
    std = jnp.exp(0.5 * log_var)                                      # EUP

    # mean_s(mu + eps_s * std) == mu + mean(eps) * std ; mean is hoisted to the wrapper (f32)
    op = mu + eps_mean_ref[...] * std

    # get_non_pad_mask (PAD == 0), applied before top-k exactly like the reference module
    op = op * (x != 0.0).astype(jnp.float32)

    # top-kappa via one-shot stable rank:
    #   rank[b,i] = #{ j : op[b,j] > op[b,i]  or  (op[b,j] == op[b,i] and j < i) }
    #   keep      = rank < kappa        (first-column-wins ties, exactly kappa kept)
    tb, d = op.shape
    op_i = op[:, :, None]                                             # (TB, D, 1)
    op_j = op[:, None, :]                                             # (TB, 1, D)
    i_idx = jax.lax.broadcasted_iota(jnp.int32, (tb, d, d), 1)
    j_idx = jax.lax.broadcasted_iota(jnp.int32, (tb, d, d), 2)
    beats = (op_j > op_i) | ((op_j == op_i) & (j_idx < i_idx))
    rank = jnp.sum(beats.astype(jnp.int32), axis=-1)                  # (TB, D)
    keep = (rank < kappa_count).astype(jnp.float32)

    out_ref[...] = op * keep


# ------------------------------- wrapper --------------------------------------

def _pick_batch_tile(b):
    """Batch tile: multiple of 8 (sublane rule) dividing B, capped so per-step VMEM stays
    small (re-derived with v7x's 64 MiB physical / 32 MiB scoped budget in mind)."""
    if b % 8 != 0:
        return b                    # single full block (block dim == full dim is legal)
    tb = 8
    while tb * 2 <= min(b, 256) and b % (tb * 2) == 0:
        tb *= 2
    return tb


def noise_generator_forward(batch, params, eps, kappa_pct, *, mxu_dtype=jnp.float32):
    """batch: (B, D) f32 event times (post-permutation); eps: (n_sample, B, D) f32."""
    B, D = batch.shape
    H = params["w1"].shape[1]
    kappa_count = int(kappa_pct / 100 * D)        # same truncation as the PyTorch module
    n_sample = eps.shape[0]

    # (1) hoist the n_sample reduction out of the kernel (exact rewrite), keep it f32
    eps_mean = jnp.mean(eps.astype(jnp.float32), axis=0)              # (B, D)

    # (3) fuse fc21 / fc22 weights & biases (done once per call here; hoist further in prod)
    w2 = jnp.concatenate([params["w21"], params["w22"]], axis=1).astype(mxu_dtype)  # (H, 2D)
    b2 = jnp.concatenate([params["b21"], params["b22"]], axis=1)                    # (1, 2D)
    w1 = params["w1"].astype(mxu_dtype)                                             # (D, H)
    b1 = params["b1"]                                                               # (1, H)

    TB = _pick_batch_tile(B)
    grid = (B // TB,)

    # (6) advisory cost estimate so XLA can overlap surrounding ops
    w_item = jnp.dtype(mxu_dtype).itemsize
    cost = pl.CostEstimate(
        flops=2 * B * D * H + 2 * B * H * (2 * D) + 6 * B * D * D,
        transcendentals=B * D,
        bytes_accessed=int(4 * (B * D + B * D + H + 2 * D + B * D)
                           + w_item * (D * H + H * 2 * D)),
    )

    kern = partial(noise_gen_kernel, kappa_count=kappa_count, out_dim=D)
    return pl.pallas_call(
        kern,
        out_shape=jax.ShapeDtypeStruct((B, D), jnp.float32),
        grid=grid,
        in_specs=[
            pl.BlockSpec((TB, D), lambda i: (i, 0)),       # x
            pl.BlockSpec((TB, D), lambda i: (i, 0)),       # eps_mean
            pl.BlockSpec((D, H), lambda i: (0, 0)),        # w1
            pl.BlockSpec((1, H), lambda i: (0, 0)),        # b1
            pl.BlockSpec((H, 2 * D), lambda i: (0, 0)),    # w2 (fused)
            pl.BlockSpec((1, 2 * D), lambda i: (0, 0)),    # b2 (fused)
        ],
        out_specs=pl.BlockSpec((TB, D), lambda i: (i, 0)),
        compiler_params=pltpu.CompilerParams(
            dimension_semantics=("parallel",)),            # (4) v7x megacore sharding
        cost_estimate=cost,
    )(batch, eps_mean, w1, b1, w2, b2)


# ----------------------------- reference & init -------------------------------

def reference_forward(x, params, eps, kappa_pct):
    """Pure-JAX reference mirroring the PyTorch noise generator (f32, HIGHEST matmuls)."""
    hi = jax.lax.Precision.HIGHEST
    B, D = x.shape
    kappa = int(kappa_pct / 100 * D)
    h = jax.nn.relu(jnp.dot(x, params["w1"], precision=hi) + params["b1"])
    mu = jnp.dot(h, params["w21"], precision=hi) + params["b21"]
    log_var = jnp.dot(h, params["w22"], precision=hi) + params["b22"]
    std = jnp.exp(0.5 * log_var)
    op = jnp.mean(mu[None] + eps * std[None], axis=0)
    op = op * (x != 0.0).astype(jnp.float32)
    idx = jnp.argsort(-op, axis=-1)[:, :kappa]             # stable -> first index wins ties
    keep = jnp.zeros_like(op).at[jnp.arange(B)[:, None], idx].set(1.0)
    return op * keep


def init_params(key, input_dim, hidden_dim):
    """Deterministic nn.Linear-style init: U(-1/sqrt(fan_in), 1/sqrt(fan_in))."""
    ks = jax.random.split(key, 6)

    def linear(kw, kb, fan_in, fan_out):
        bound = 1.0 / jnp.sqrt(jnp.float32(fan_in))
        w = jax.random.uniform(kw, (fan_in, fan_out), jnp.float32, -bound, bound)
        b = jax.random.uniform(kb, (1, fan_out), jnp.float32, -bound, bound)
        return w, b

    w1, b1 = linear(ks[0], ks[1], input_dim, hidden_dim)
    w21, b21 = linear(ks[2], ks[3], hidden_dim, input_dim)
    w22, b22 = linear(ks[4], ks[5], hidden_dim, input_dim)
    return {"w1": w1, "b1": b1, "w21": w21, "b21": b21, "w22": w22, "b22": b22}


# --------------------------------- demo ----------------------------------------

if __name__ == "__main__":
    input_dim = 16      # padded sequence length / feature dim fed to fc1
    hidden_dim = 32
    batch_size = 8
    n_sample = 100
    kappa_pct = 50      # int(50/100 * 16) = 8 entries kept per row

    key = jax.random.PRNGKey(0)
    k_param, k_x, k_eps = jax.random.split(key, 3)

    params = init_params(k_param, input_dim, hidden_dim)

    x = jax.random.normal(k_x, (batch_size, input_dim), jnp.float32)
    x = x.at[0, 12:].set(0.0)   # emulate PAD (== 0) tail in one event sequence

    eps = jax.random.normal(k_eps, (n_sample, batch_size, input_dim), jnp.float32)

    out = noise_generator_forward(x, params, eps, kappa_pct)
    jax.block_until_ready(out)

    ref = reference_forward(x, params, eps, kappa_pct)
    assert out.shape == (batch_size, input_dim)
    assert jnp.allclose(out, ref, rtol=1e-3, atol=1e-3)
    kappa = int(kappa_pct / 100 * input_dim)
    assert int(jnp.max(jnp.sum(out != 0.0, axis=-1))) <= kappa

    print("KERNEL_OK")
</pallas_src>

<mosaic_0001>
module attributes {stable_mosaic.version = 11 : i64} {
  func.func @noise_gen_kernel(%arg0: i32, %arg1: memref<8x16xf32, #tpu.memory_space<vmem>>, %arg2: memref<8x16xf32, #tpu.memory_space<vmem>>, %arg3: memref<16x32xf32, #tpu.memory_space<vmem>>, %arg4: memref<1x32xf32, #tpu.memory_space<vmem>>, %arg5: memref<32x32xf32, #tpu.memory_space<vmem>>, %arg6: memref<1x32xf32, #tpu.memory_space<vmem>>, %arg7: memref<8x16xf32, #tpu.memory_space<vmem>>) attributes {dimension_semantics = [#tpu.dimension_semantics<parallel>], iteration_bounds = array<i64: 1>, scalar_prefetch = 0 : i64, scratch_operands = 0 : i64, tpu.core_type = #tpu.core_type<tc>, window_params = [{transform_indices = @transform_0, window_bounds = array<i64: 8, 16>}, {transform_indices = @transform_1, window_bounds = array<i64: 8, 16>}, {pipeline_mode = #tpu.pipeline_mode<synchronous>, transform_indices = @transform_2, window_bounds = array<i64: 16, 32>}, {pipeline_mode = #tpu.pipeline_mode<synchronous>, transform_indices = @transform_3, window_bounds = array<i64: 1, 32>}, {pipeline_mode = #tpu.pipeline_mode<synchronous>, transform_indices = @transform_4, window_bounds = array<i64: 32, 32>}, {pipeline_mode = #tpu.pipeline_mode<synchronous>, transform_indices = @transform_5, window_bounds = array<i64: 1, 32>}, {transform_indices = @transform_6, window_bounds = array<i64: 8, 16>}]} {
    %c0 = arith.constant 0 : index
    %c0_0 = arith.constant 0 : index
    %0 = vector.load %arg1[%c0, %c0_0] : memref<8x16xf32, #tpu.memory_space<vmem>>, vector<8x16xf32>
    %c0_1 = arith.constant 0 : index
    %c0_2 = arith.constant 0 : index
    %1 = vector.load %arg3[%c0_1, %c0_2] : memref<16x32xf32, #tpu.memory_space<vmem>>, vector<16x32xf32>
    %cst = arith.constant dense<0.000000e+00> : vector<8x32xf32>
    %2 = tpu.matmul %0, %1, %cst {dimension_numbers = #tpu.dot_dimension_numbers<[1], [0], [0], [1], [0, 0, 1, 1], [], []>} : vector<8x16xf32>, vector<16x32xf32>, vector<8x32xf32> -> vector<8x32xf32>
    %c0_3 = arith.constant 0 : index
    %c0_4 = arith.constant 0 : index
    %3 = vector.load %arg4[%c0_3, %c0_4] : memref<1x32xf32, #tpu.memory_space<vmem>>, vector<1x32xf32>
    %4 = vector.broadcast %3 : vector<1x32xf32> to vector<8x32xf32>
    %5 = arith.addf %2, %4 : vector<8x32xf32>
    %cst_5 = arith.constant 0.000000e+00 : f32
    %6 = vector.broadcast %cst_5 : f32 to vector<8x32xf32>
    %7 = arith.maximumf %5, %6 : vector<8x32xf32>
    %c0_6 = arith.constant 0 : index
    %c0_7 = arith.constant 0 : index
    %8 = vector.load %arg5[%c0_6, %c0_7] : memref<32x32xf32, #tpu.memory_space<vmem>>, vector<32x32xf32>
    %cst_8 = arith.constant dense<0.000000e+00> : vector<8x32xf32>
    %9 = tpu.matmul %7, %8, %cst_8 {dimension_numbers = #tpu.dot_dimension_numbers<[1], [0], [0], [1], [0, 0, 1, 1], [], []>} : vector<8x32xf32>, vector<32x32xf32>, vector<8x32xf32> -> vector<8x32xf32>
    %c0_9 = arith.constant 0 : index
    %c0_10 = arith.constant 0 : index
    %10 = vector.load %arg6[%c0_9, %c0_10] : memref<1x32xf32, #tpu.memory_space<vmem>>, vector<1x32xf32>
    %11 = vector.broadcast %10 : vector<1x32xf32> to vector<8x32xf32>
    %12 = arith.addf %9, %11 : vector<8x32xf32>
    %13 = vector.extract_strided_slice %12 {offsets = [0, 0], sizes = [8, 16], strides = [1, 1]} : vector<8x32xf32> to vector<8x16xf32>
    %14 = vector.extract_strided_slice %12 {offsets = [0, 16], sizes = [8, 16], strides = [1, 1]} : vector<8x32xf32> to vector<8x16xf32>
    %cst_11 = arith.constant 5.000000e-01 : f32
    %15 = vector.broadcast %cst_11 : f32 to vector<8x16xf32>
    %16 = arith.mulf %15, %14 : vector<8x16xf32>
    %17 = math.exp %16 : vector<8x16xf32>
    %c0_12 = arith.constant 0 : index
    %c0_13 = arith.constant 0 : index
    %18 = vector.load %arg2[%c0_12, %c0_13] : memref<8x16xf32, #tpu.memory_space<vmem>>, vector<8x16xf32>
    %19 = arith.mulf %18, %17 : vector<8x16xf32>
    %20 = arith.addf %13, %19 : vector<8x16xf32>
    %cst_14 = arith.constant 0.000000e+00 : f32
    %21 = vector.broadcast %cst_14 : f32 to vector<8x16xf32>
    %22 = arith.cmpf one, %0, %21 : vector<8x16xf32>
    %23 = arith.extui %22 : vector<8x16xi1> to vector<8x16xi32>
    %24 = arith.sitofp %23 : vector<8x16xi32> to vector<8x16xf32>
    %25 = arith.mulf %20, %24 : vector<8x16xf32>
    %26 = vector.shape_cast %25 : vector<8x16xf32> to vector<8x16x1xf32>
    %27 = vector.shape_cast %25 : vector<8x16xf32> to vector<8x1x16xf32>
    %28 = tpu.iota {dimensions = array<i32: 1>} : vector<8x16x16xi32>
    %29 = tpu.iota {dimensions = array<i32: 2>} : vector<8x16x16xi32>
    %30 = vector.broadcast %27 : vector<8x1x16xf32> to vector<8x16x16xf32>
    %31 = vector.broadcast %26 : vector<8x16x1xf32> to vector<8x16x16xf32>
    %32 = arith.cmpf ogt, %30, %31 : vector<8x16x16xf32>
    %33 = vector.broadcast %27 : vector<8x1x16xf32> to vector<8x16x16xf32>
    %34 = vector.broadcast %26 : vector<8x16x1xf32> to vector<8x16x16xf32>
    %35 = arith.cmpf oeq, %33, %34 : vector<8x16x16xf32>
    %36 = arith.cmpi slt, %29, %28 : vector<8x16x16xi32>
    %37 = arith.andi %35, %36 : vector<8x16x16xi1>
    %38 = arith.ori %32, %37 : vector<8x16x16xi1>
    %39 = arith.extui %38 : vector<8x16x16xi1> to vector<8x16x16xi32>
    %cst_15 = arith.constant dense<0> : vector<8x16xi32>
    %40 = vector.multi_reduction <add>, %39, %cst_15 [2] : vector<8x16x16xi32> to vector<8x16xi32>
    %c8_i32 = arith.constant 8 : i32
    %41 = vector.broadcast %c8_i32 : i32 to vector<8x16xi32>
    %42 = arith.cmpi slt, %40, %41 : vector<8x16xi32>
    %43 = arith.extui %42 : vector<8x16xi1> to vector<8x16xi32>
    %44 = arith.sitofp %43 : vector<8x16xi32> to vector<8x16xf32>
    %45 = arith.mulf %25, %44 : vector<8x16xf32>
    %c0_16 = arith.constant 0 : index
    %c0_17 = arith.constant 0 : index
    %46 = vector.load %arg7[%c0_16, %c0_17] : memref<8x16xf32, #tpu.memory_space<vmem>>, vector<8x16xf32>
    tpu.vector_store %arg7[%c0_16, %c0_17], %45 {strides = array<i32>} : memref<8x16xf32, #tpu.memory_space<vmem>>, vector<8x16xf32>,
    return
  }
  func.func @transform_0(%arg0: i32) -> (i32, i32) {
    %c0_i32 = arith.constant 0 : i32
    %c0_i32_0 = arith.constant 0 : i32
    return %arg0, %c0_i32 : i32, i32
  }
  func.func @transform_1(%arg0: i32) -> (i32, i32) {
    %c0_i32 = arith.constant 0 : i32
    %c0_i32_0 = arith.constant 0 : i32
    return %arg0, %c0_i32 : i32, i32
  }
  func.func @transform_2(%arg0: i32) -> (i32, i32) {
    %c0_i32 = arith.constant 0 : i32
    %c0_i32_0 = arith.constant 0 : i32
    %c0_i32_1 = arith.constant 0 : i32
    return %c0_i32, %c0_i32_0 : i32, i32
  }
  func.func @transform_3(%arg0: i32) -> (i32, i32) {
    %c0_i32 = arith.constant 0 : i32
    %c0_i32_0 = arith.constant 0 : i32
    %c0_i32_1 = arith.constant 0 : i32
    return %c0_i32, %c0_i32_0 : i32, i32
  }
  func.func @transform_4(%arg0: i32) -> (i32, i32) {
    %c0_i32 = arith.constant 0 : i32
    %c0_i32_0 = arith.constant 0 : i32
    %c0_i32_1 = arith.constant 0 : i32
    return %c0_i32, %c0_i32_0 : i32, i32
  }
  func.func @transform_5(%arg0: i32) -> (i32, i32) {
    %c0_i32 = arith.constant 0 : i32
    %c0_i32_0 = arith.constant 0 : i32
    %c0_i32_1 = arith.constant 0 : i32
    return %c0_i32, %c0_i32_0 : i32, i32
  }
  func.func @transform_6(%arg0: i32) -> (i32, i32) {
    %c0_i32 = arith.constant 0 : i32
    %c0_i32_0 = arith.constant 0 : i32
    return %arg0, %c0_i32 : i32, i32
  }
}

</mosaic_0001>

<llo_original>
// kernel: tpu_custom_call.1
$region0: #{tpu_custom_call.1}
  #allocation0 [shape = 'u32[]', space=smem, size = 0x4, offset = 0x4, fixed_abs, tag = 'smem constant byte address 0x4 - core index']
  #allocation1 [shape = 'u32[72,128]{1,0:T(1,128)}', space=vmem, size = 0x9000, scoped, tag = 'internal scratch']
  %s0 = inlined_call_operand.hbm [shape: f32[8,16], index: 0, kind: input, shape index: {}]
  %s1 = inlined_call_operand.hbm [shape: f32[8,16], index: 1, kind: input, shape index: {}]
  %s2 = inlined_call_operand.hbm [shape: f32[16,32], index: 2, kind: input, shape index: {}]
  %s3 = inlined_call_operand.vmem [shape: f32[1,32], index: 3, kind: input, shape index: {}]
  %s4 = inlined_call_operand.hbm [shape: f32[32,32], index: 4, kind: input, shape index: {}]
  %s5 = inlined_call_operand.vmem [shape: f32[1,32], index: 5, kind: input, shape index: {}]
  %s6 = inlined_call_operand.hbm [shape: f32[8,16], index: 6, kind: output, shape index: {}]
  %s7 = sld [smem:[#allocation0]]
  $region50: #{tpu_custom_call.1} parent=0
    _
  %s9 = ssub.s32 1, %s7
  %s10 = scalar_select 0, %s9, %s7
  $region1: #{tpu_custom_call.1} parent=0
    #allocation2 [shape = 'u8[4096]{0}', space=vmem, size = 0x1000, scoped, tag = 'input window, operand 0, single buffered']
    #allocation3 [shape = 's32[1]{0}', space=sflag, size = 0x4, scoped, tag = 'scoped memory for tpu_custom_call.1']
    #allocation4 [shape = 's32[1]{0}', space=sflag, size = 0x4, scoped, tag = 'scoped memory for tpu_custom_call.1']
    #allocation5 [shape = 'u8[4096]{0}', space=vmem, size = 0x1000, scoped, tag = 'input window, operand 1, single buffered']
    #allocation6 [shape = 's32[1]{0}', space=sflag, size = 0x4, scoped, tag = 'scoped memory for tpu_custom_call.1']
    #allocation7 [shape = 'u8[8192]{0}', space=vmem, size = 0x2000, scoped, tag = 'input window, operand 2, single buffered']
    #allocation8 [shape = 'u8[16384]{0}', space=vmem, size = 0x4000, scoped, tag = 'input window, operand 4, single buffered']
    #allocation9 [shape = 's32[1]{0}', space=sflag, size = 0x4, scoped, tag = 'scoped memory for tpu_custom_call.1']
    #allocation10 [shape = 'u8[4096]{0}', space=vmem, size = 0x1000, scoped, tag = 'output window, operand 0, single buffered']
    %11 = vsyncpa [#allocation3], 0
    %12 = vsyncpa [#allocation6], 0
    %13 = vsyncpa [#allocation9], 0
    %14 = vsyncpa [#allocation4], 0
    // Predicated region
    $region2: #{tpu_custom_call.1} parent=1 // pred_check
      _
    $region3: #{tpu_custom_call.1} parent=1 // pred_check_branch
      %16 = sbr.rel (0) target = $region5
    $region4: #{tpu_custom_call.1} parent=1 // pred_region
      %18 = vsyncadd [#allocation3], 0
      %s20 = sshll.u32 %s0, 4
      %s21 = int_to_ptr.hbm [resolvable:$true] %s20
      %s22 = sshll.u32 [#allocation2], 4
      %s23 = int_to_ptr.vmem [resolvable:$true] %s22
      %25 = dma.hbm_to_vmem [thread:$0]  %s21, 128, %s23, [#allocation3]
    $region5: #{tpu_custom_call.1} parent=1 // pred_fallthru
      _
    // Predicated region
    $region6: #{tpu_custom_call.1} parent=1 // pred_check
      _
    $region7: #{tpu_custom_call.1} parent=1 // pred_check_branch
      %27 = sbr.rel (0) target = $region9
    $region8: #{tpu_custom_call.1} parent=1 // pred_region
      %29 = vsyncadd [#allocation6], 0
      %s31 = sshll.u32 %s1, 4
      %s32 = int_to_ptr.hbm [resolvable:$true] %s31
      %s33 = sshll.u32 [#allocation5], 4
      %s34 = int_to_ptr.vmem [resolvable:$true] %s33
      %36 = dma.hbm_to_vmem [thread:$0]  %s32, 128, %s34, [#allocation6]
    $region9: #{tpu_custom_call.1} parent=1 // pred_fallthru
      _
    // Predicated region
    $region10: #{tpu_custom_call.1} parent=1 // pred_check
      _
    $region11: #{tpu_custom_call.1} parent=1 // pred_check_branch
      %38 = sbr.rel (0) target = $region13
    $region12: #{tpu_custom_call.1} parent=1 // pred_region
      %40 = vsyncadd [#allocation6], 0
      %s41 = sshll.u32 %s2, 4
      %s42 = int_to_ptr.hbm [resolvable:$true] %s41
      %s43 = sshll.u32 [#allocation7], 4
      %s44 = int_to_ptr.vmem [resolvable:$true] %s43
      %49 = dma.hbm_to_vmem [thread:$0]  %s42, 256, %s44, [#allocation6], 128, 128, 8
    $region13: #{tpu_custom_call.1} parent=1 // pred_fallthru
      _
    // Predicated region
    $region14: #{tpu_custom_call.1} parent=1 // pred_check
      _
    $region15: #{tpu_custom_call.1} parent=1 // pred_check_branch
      %51 = sbr.rel (0) target = $region17
    $region16: #{tpu_custom_call.1} parent=1 // pred_region
      _
    $region17: #{tpu_custom_call.1} parent=1 // pred_fallthru
      _
    // Predicated region
    $region18: #{tpu_custom_call.1} parent=1 // pred_check
      _
    $region19: #{tpu_custom_call.1} parent=1 // pred_check_branch
      %53 = sbr.rel (0) target = $region21
    $region20: #{tpu_custom_call.1} parent=1 // pred_region
      %55 = vsyncadd [#allocation9], 0
      %s56 = sshll.u32 %s4, 4
      %s57 = int_to_ptr.hbm [resolvable:$true] %s56
      %s58 = sshll.u32 [#allocation8], 4
      %s59 = int_to_ptr.vmem [resolvable:$true] %s58
      %64 = dma.hbm_to_vmem [thread:$0]  %s57, 512, %s59, [#allocation9], 128, 128, 8
    $region21: #{tpu_custom_call.1} parent=1 // pred_fallthru
      _
    // Predicated region
    $region22: #{tpu_custom_call.1} parent=1 // pred_check
      _
    $region23: #{tpu_custom_call.1} parent=1 // pred_check_branch
      %66 = sbr.rel (0) target = $region25
    $region24: #{tpu_custom_call.1} parent=1 // pred_region
      _
    $region25: #{tpu_custom_call.1} parent=1 // pred_fallthru
      _
    // Predicated region
    $region26: #{tpu_custom_call.1} parent=1 // pred_check
      _
    $region27: #{tpu_custom_call.1} parent=1 // pred_check_branch
      %68 = sbr.rel (0) target = $region29
    $region28: #{tpu_custom_call.1} parent=1 // pred_region
      %70 = dma.done [#allocation3], 128
    $region29: #{tpu_custom_call.1} parent=1 // pred_fallthru
      _
    // Predicated region
    $region30: #{tpu_custom_call.1} parent=1 // pred_check
      _
    $region31: #{tpu_custom_call.1} parent=1 // pred_check_branch
      %72 = sbr.rel (0) target = $region33
    $region32: #{tpu_custom_call.1} parent=1 // pred_region
      %74 = dma.done [#allocation6], 128
    $region33: #{tpu_custom_call.1} parent=1 // pred_fallthru
      _
    // Predicated region
    $region34: #{tpu_custom_call.1} parent=1 // pred_check
      _
    $region35: #{tpu_custom_call.1} parent=1 // pred_check_branch
      %76 = sbr.rel (0) target = $region37
    $region36: #{tpu_custom_call.1} parent=1 // pred_region
      %78 = dma.done [#allocation6], 256
    $region37: #{tpu_custom_call.1} parent=1 // pred_fallthru
      _
    // Predicated region
    $region38: #{tpu_custom_call.1} parent=1 // pred_check
      _
    $region39: #{tpu_custom_call.1} parent=1 // pred_check_branch
      %80 = sbr.rel (0) target = $region41
    $region40: #{tpu_custom_call.1} parent=1 // pred_region
      %82 = dma.done [#allocation9], 512
    $region41: #{tpu_custom_call.1} parent=1 // pred_fallthru
      _
    %v83 = vld [vmem:[#allocation2] sm:$0xff]
    %v84 = vld [vmem:[#allocation7] sm:$0xff]
    %v85 = vld [vmem:[#allocation7 + $0x8] sm:$0xff]
    %v86 = vld [vmem:[%s3] sm:$0x1]
    %v88 = vperm.slane %v86, 0
    %vm90 = vcmask 130048
    %v92 = vsel %vm90, %v83, 0
    %94 = vmatpush.msra.mxu0 0.0
    %95 = vmatpush.msra.mxu0 0.0
    %96 = vmatpush.msra.mxu0 0.0
    %97 = vmatpush.msra.mxu0 0.0
    %98 = vmatpush.msra.mxu0 0.0
    %99 = vmatpush.msra.mxu0 0.0
    %100 = vmatpush.msra.mxu0 0.0
    %101 = vmatpush.msra.mxu0 0.0
    %102 = vmatpush.msra.mxu0 0.0
    %103 = vmatpush.msra.mxu0 0.0
    %104 = vmatpush.msra.mxu0 0.0
    %105 = vmatpush.msra.mxu0 0.0
    %106 = vmatpush.msra.mxu0 0.0
    %107 = vmatpush.msra.mxu0 0.0
    %108 = vmatpush.msra.mxu0 %v85
    %109 = vmatpush.msra.mxu0 %v84
    %110 = vmatmul.f32.gmra.mxu0 %v92
    %v111 = vpop.f32.mrf.mxu0
    %v112 = vadd.f32 %v88, %v111
    %113 = vdwg.mxu0
    %v114 = vmax.f32 %v112, 0.0
    %v115 = vld [vmem:[#allocation8] sm:$0xff]
    %v116 = vld [vmem:[#allocation8 + $0x8] sm:$0xff]
    %v117 = vld [vmem:[#allocation8 + $0x10] sm:$0xff]
    %v118 = vld [vmem:[#allocation8 + $0x18] sm:$0xff]
    %v119 = vld [vmem:[%s5] sm:$0x1]
    %v121 = vperm.slane %v119, 0
    %vm123 = vcmask 261120
    %v125 = vsel %vm123, %v114, 0
    %127 = vmatpush.msra.mxu0 0.0
    %128 = vmatpush.msra.mxu0 0.0
    %129 = vmatpush.msra.mxu0 0.0
    %130 = vmatpush.msra.mxu0 0.0
    %131 = vmatpush.msra.mxu0 0.0
    %132 = vmatpush.msra.mxu0 0.0
    %133 = vmatpush.msra.mxu0 0.0
    %134 = vmatpush.msra.mxu0 0.0
    %135 = vmatpush.msra.mxu0 0.0
    %136 = vmatpush.msra.mxu0 0.0
    %137 = vmatpush.msra.mxu0 0.0
    %138 = vmatpush.msra.mxu0 0.0
    %139 = vmatpush.msra.mxu0 %v118
    %140 = vmatpush.msra.mxu0 %v117
    %141 = vmatpush.msra.mxu0 %v116
    %142 = vmatpush.msra.mxu0 %v115
    %143 = vmatmul.f32.gmra.mxu0 %v125
    %v144 = vpop.f32.mrf.mxu0
    %v145 = vadd.f32 %v121, %v144
    %146 = vdwg.mxu0
    %v147 = vmul.f32 %v145, 0.5
    %v148 = vmul.f32 %v147, 1.442695
    %v149 = vpow.pop %v148
    %v150 = vld [vmem:[#allocation5] sm:$0xff]
    %152 = vrot.lane.b32.xlu0 %v149, 112
    %v153 = vpop.permute.xlu0 %152
    %v155 = vmul.f32 %v150, %v153
    %v156 = vadd.f32 %v145, %v155
    %vm157 = vcmp.ne.f32.partialorder %v83, 0.0
    %v158 = vsel %vm157, 1, 0
    %v159 = vcvt.s32.f32 %v158
    %v160 = vmul.f32 %v156, %v159
    %v161 = vperm.slane %v160, 0
    %v162 = vlaneseq
    %v163 = vshrl.u32 %v162, 7
    %165 = vset.pattern.permute.xlu0 %v163
    %166 = vperm.xlu0 %165, %v161
    %v167 = vpop.permute.xlu0 %166
    %v168 = vlaneseq
    %v169 = vshrl.u32 %v168, 7
    %v170 = vadd.s32 %v169, 8
    %171 = vset.pattern.permute.xlu0 %v170
    %172 = vperm.xlu0 %171, %v161
    %v173 = vpop.permute.xlu0 %172
    %v174 = vperm.slane %v160, 1
    %v175 = vlaneseq
    %v176 = vshrl.u32 %v175, 7
    %178 = vset.pattern.permute.xlu0 %v176
    %179 = vperm.xlu0 %178, %v174
    %v180 = vpop.permute.xlu0 %179
    %v181 = vlaneseq
    %v182 = vshrl.u32 %v181, 7
    %v183 = vadd.s32 %v182, 8
    %184 = vset.pattern.permute.xlu0 %v183
    %185 = vperm.xlu0 %184, %v174
    %v186 = vpop.permute.xlu0 %185
    %v187 = vperm.slane %v160, 2
    %v188 = vlaneseq
    %v189 = vshrl.u32 %v188, 7
    %191 = vset.pattern.permute.xlu0 %v189
    %192 = vperm.xlu0 %191, %v187
    %v193 = vpop.permute.xlu0 %192
    %v194 = vlaneseq
    %v195 = vshrl.u32 %v194, 7
    %v196 = vadd.s32 %v195, 8
    %197 = vset.pattern.permute.xlu0 %v196
    %198 = vperm.xlu0 %197, %v187
    %v199 = vpop.permute.xlu0 %198
    %v200 = vperm.slane %v160, 3
    %v201 = vlaneseq
    %v202 = vshrl.u32 %v201, 7
    %204 = vset.pattern.permute.xlu0 %v202
    %205 = vperm.xlu0 %204, %v200
    %v206 = vpop.permute.xlu0 %205
    %v207 = vlaneseq
    %v208 = vshrl.u32 %v207, 7
    %v209 = vadd.s32 %v208, 8
    %210 = vset.pattern.permute.xlu0 %v209
    %211 = vperm.xlu0 %210, %v200
    %v212 = vpop.permute.xlu0 %211
    %v213 = vperm.slane %v160, 4
    %v214 = vlaneseq
    %v215 = vshrl.u32 %v214, 7
    %217 = vset.pattern.permute.xlu0 %v215
    %218 = vperm.xlu0 %217, %v213
    %v219 = vpop.permute.xlu0 %218
    %v220 = vlaneseq
    %v221 = vshrl.u32 %v220, 7
    %v222 = vadd.s32 %v221, 8
    %223 = vset.pattern.permute.xlu0 %v222
    %224 = vperm.xlu0 %223, %v213
    %v225 = vpop.permute.xlu0 %224
    %v226 = vperm.slane %v160, 5
    %v227 = vlaneseq
    %v228 = vshrl.u32 %v227, 7
    %230 = vset.pattern.permute.xlu0 %v228
    %231 = vperm.xlu0 %230, %v226
    %v232 = vpop.permute.xlu0 %231
    %v233 = vlaneseq
    %v234 = vshrl.u32 %v233, 7
    %v235 = vadd.s32 %v234, 8
    %236 = vset.pattern.permute.xlu0 %v235
    %237 = vperm.xlu0 %236, %v226
    %v238 = vpop.permute.xlu0 %237
    %v239 = vperm.slane %v160, 6
    %v240 = vlaneseq
    %v241 = vshrl.u32 %v240, 7
    %243 = vset.pattern.permute.xlu0 %v241
    %244 = vperm.xlu0 %243, %v239
    %v245 = vpop.permute.xlu0 %244
    %v246 = vlaneseq
    %v247 = vshrl.u32 %v246, 7
    %v248 = vadd.s32 %v247, 8
    %249 = vset.pattern.permute.xlu0 %v248
    %250 = vperm.xlu0 %249, %v239
    %v251 = vpop.permute.xlu0 %250
    %v252 = vperm.slane %v160, 7
    %v253 = vlaneseq
    %v254 = vshrl.u32 %v253, 7
    %256 = vset.pattern.permute.xlu0 %v254
    %257 = vperm.xlu0 %256, %v252
    %v258 = vpop.permute.xlu0 %257
    %v259 = vlaneseq
    %v260 = vshrl.u32 %v259, 7
    %v261 = vadd.s32 %v260, 8
    %262 = vset.pattern.permute.xlu0 %v261
    %263 = vperm.xlu0 %262, %v252
    %v264 = vpop.permute.xlu0 %263
    %v266 = vrot.slane %v160, 1
    %v267 = vrot.slane %v160, 2
    %v268 = vrot.slane %v160, 3
    %v269 = vrot.slane %v160, 4
    %v270 = vrot.slane %v160, 5
    %v271 = vrot.slane %v160, 6
    %v272 = vrot.slane %v160, 7
    %v273 = vlaneseq
    %v274 = vshrl.u32 %v273, 7
    %v275 = vadd.s32 %v274, 8
    %v276 = vlaneseq
    %v277 = vand.u32 %v276, 127
    %v278 = vperm.slane %v160, 0
    %v279 = vperm.slane %v266, 0
    %v280 = vperm.slane %v267, 0
    %v281 = vperm.slane %v268, 0
    %v282 = vperm.slane %v269, 0
    %v283 = vperm.slane %v270, 0
    %v284 = vperm.slane %v271, 0
    %v285 = vperm.slane %v272, 0
    %vm294 = vcmp.gt.f32.partialorder %v278, %v167
    %vm295 = vcmp.gt.f32.partialorder %v278, %v173
    %vm296 = vcmp.gt.f32.partialorder %v279, %v180
    %vm297 = vcmp.gt.f32.partialorder %v279, %v186
    %vm298 = vcmp.gt.f32.partialorder %v280, %v193
    %vm299 = vcmp.gt.f32.partialorder %v280, %v199
    %vm300 = vcmp.gt.f32.partialorder %v281, %v206
    %vm301 = vcmp.gt.f32.partialorder %v281, %v212
    %vm302 = vcmp.gt.f32.partialorder %v282, %v219
    %vm303 = vcmp.gt.f32.partialorder %v282, %v225
    %vm304 = vcmp.gt.f32.partialorder %v283, %v232
    %vm305 = vcmp.gt.f32.partialorder %v283, %v238
    %vm306 = vcmp.gt.f32.partialorder %v284, %v245
    %vm307 = vcmp.gt.f32.partialorder %v284, %v251
    %vm308 = vcmp.gt.f32.partialorder %v285, %v258
    %vm309 = vcmp.gt.f32.partialorder %v285, %v264
    %vm310 = vcmp.eq.f32.partialorder %v278, %v167
    %vm311 = vcmp.eq.f32.partialorder %v278, %v173
    %vm312 = vcmp.eq.f32.partialorder %v279, %v180
    %vm313 = vcmp.eq.f32.partialorder %v279, %v186
    %vm314 = vcmp.eq.f32.partialorder %v280, %v193
    %vm315 = vcmp.eq.f32.partialorder %v280, %v199
    %vm316 = vcmp.eq.f32.partialorder %v281, %v206
    %vm317 = vcmp.eq.f32.partialorder %v281, %v212
    %vm318 = vcmp.eq.f32.partialorder %v282, %v219
    %vm319 = vcmp.eq.f32.partialorder %v282, %v225
    %vm320 = vcmp.eq.f32.partialorder %v283, %v232
    %vm321 = vcmp.eq.f32.partialorder %v283, %v238
    %vm322 = vcmp.eq.f32.partialorder %v284, %v245
    %vm323 = vcmp.eq.f32.partialorder %v284, %v251
    %vm324 = vcmp.eq.f32.partialorder %v285, %v258
    %vm325 = vcmp.eq.f32.partialorder %v285, %v264
    %vm326 = vcmp.lt.s32.totalorder %v277, %v274
    %vm327 = vcmp.lt.s32.totalorder %v277, %v275
    %vm328 = vmand %vm310, %vm326
    %vm329 = vmand %vm311, %vm327
    %vm330 = vmand %vm312, %vm326
    %vm331 = vmand %vm313, %vm327
    %vm332 = vmand %vm314, %vm326
    %vm333 = vmand %vm315, %vm327
    %vm334 = vmand %vm316, %vm326
    %vm335 = vmand %vm317, %vm327
    %vm336 = vmand %vm318, %vm326
    %vm337 = vmand %vm319, %vm327
    %vm338 = vmand %vm320, %vm326
    %vm339 = vmand %vm321, %vm327
    %vm340 = vmand %vm322, %vm326
    %vm341 = vmand %vm323, %vm327
    %vm342 = vmand %vm324, %vm326
    %vm343 = vmand %vm325, %vm327
    %vm344 = vmor %vm294, %vm328
    %vm345 = vmor %vm295, %vm329
    %vm346 = vmor %vm296, %vm330
    %vm347 = vmor %vm297, %vm331
    %vm348 = vmor %vm298, %vm332
    %vm349 = vmor %vm299, %vm333
    %vm350 = vmor %vm300, %vm334
    %vm351 = vmor %vm301, %vm335
    %vm352 = vmor %vm302, %vm336
    %vm353 = vmor %vm303, %vm337
    %vm354 = vmor %vm304, %vm338
    %vm355 = vmor %vm305, %vm339
    %vm356 = vmor %vm306, %vm340
    %vm357 = vmor %vm307, %vm341
    %vm358 = vmor %vm308, %vm342
    %vm359 = vmor %vm309, %vm343
    %v360 = vsel %vm344, 1, 0
    %v361 = vsel %vm345, 1, 0
    %v362 = vsel %vm346, 1, 0
    %v363 = vsel %vm347, 1, 0
    %v364 = vsel %vm348, 1, 0
    %v365 = vsel %vm349, 1, 0
    %v366 = vsel %vm350, 1, 0
    %v367 = vsel %vm351, 1, 0
    %v368 = vsel %vm352, 1, 0
    %v369 = vsel %vm353, 1, 0
    %v370 = vsel %vm354, 1, 0
    %v371 = vsel %vm355, 1, 0
    %v372 = vsel %vm356, 1, 0
    %v373 = vsel %vm357, 1, 0
    %v374 = vsel %vm358, 1, 0
    %v375 = vsel %vm359, 1, 0
    %v376 = vsel %vm90, %v360, 0
    %v377 = vand.u32 %v376, 65535
    %v378 = vshrl.u32 %v376, 16
    %v379 = vcvt.s32.f32 %v377
    %v380 = vcvt.s32.f32 %v378
    %381 = vadd.xlane.f32.xlu0 %v379
    %v382 = vpop.xlane.xlu0 %381
    %383 = vadd.xlane.f32.xlu0 %v380
    %v384 = vpop.xlane.xlu0 %383
    %v385 = vcvt.f32.s32 %v382
    %v386 = vcvt.f32.s32 %v384
    %v387 = vshll.u32 %v386, 16
    %v388 = vadd.s32 %v387, %v385
    %v389 = vsel %vm90, %v361, 0
    %v390 = vand.u32 %v389, 65535
    %v391 = vshrl.u32 %v389, 16
    %v392 = vcvt.s32.f32 %v390
    %v393 = vcvt.s32.f32 %v391
    %394 = vadd.xlane.f32.xlu0 %v392
    %v395 = vpop.xlane.xlu0 %394
    %396 = vadd.xlane.f32.xlu0 %v393
    %v397 = vpop.xlane.xlu0 %396
    %v398 = vcvt.f32.s32 %v395
    %v399 = vcvt.f32.s32 %v397
    %v400 = vshll.u32 %v399, 16
    %v401 = vadd.s32 %v400, %v398
    %v402 = vsel %vm90, %v362, 0
    %v403 = vand.u32 %v402, 65535
    %v404 = vshrl.u32 %v402, 16
    %v405 = vcvt.s32.f32 %v403
    %v406 = vcvt.s32.f32 %v404
    %407 = vadd.xlane.f32.xlu0 %v405
    %v408 = vpop.xlane.xlu0 %407
    %409 = vadd.xlane.f32.xlu0 %v406
    %v410 = vpop.xlane.xlu0 %409
    %v411 = vcvt.f32.s32 %v408
    %v412 = vcvt.f32.s32 %v410
    %v413 = vshll.u32 %v412, 16
    %v414 = vadd.s32 %v413, %v411
    %v415 = vsel %vm90, %v363, 0
    %v416 = vand.u32 %v415, 65535
    %v417 = vshrl.u32 %v415, 16
    %v418 = vcvt.s32.f32 %v416
    %v419 = vcvt.s32.f32 %v417
    %420 = vadd.xlane.f32.xlu0 %v418
    %v421 = vpop.xlane.xlu0 %420
    %422 = vadd.xlane.f32.xlu0 %v419
    %v423 = vpop.xlane.xlu0 %422
    %v424 = vcvt.f32.s32 %v421
    %v425 = vcvt.f32.s32 %v423
    %v426 = vshll.u32 %v425, 16
    %v427 = vadd.s32 %v426, %v424
    %v428 = vsel %vm90, %v364, 0
    %v429 = vand.u32 %v428, 65535
    %v430 = vshrl.u32 %v428, 16
    %v431 = vcvt.s32.f32 %v429
    %v432 = vcvt.s32.f32 %v430
    %433 = vadd.xlane.f32.xlu0 %v431
    %v434 = vpop.xlane.xlu0 %433
    %435 = vadd.xlane.f32.xlu0 %v432
    %v436 = vpop.xlane.xlu0 %435
    %v437 = vcvt.f32.s32 %v434
    %v438 = vcvt.f32.s32 %v436
    %v439 = vshll.u32 %v438, 16
    %v440 = vadd.s32 %v439, %v437
    %v441 = vsel %vm90, %v365, 0
    %v442 = vand.u32 %v441, 65535
    %v443 = vshrl.u32 %v441, 16
    %v444 = vcvt.s32.f32 %v442
    %v445 = vcvt.s32.f32 %v443
    %446 = vadd.xlane.f32.xlu0 %v444
    %v447 = vpop.xlane.xlu0 %446
    %448 = vadd.xlane.f32.xlu0 %v445
    %v449 = vpop.xlane.xlu0 %448
    %v450 = vcvt.f32.s32 %v447
    %v451 = vcvt.f32.s32 %v449
    %v452 = vshll.u32 %v451, 16
    %v453 = vadd.s32 %v452, %v450
    %v454 = vsel %vm90, %v366, 0
    %v455 = vand.u32 %v454, 65535
    %v456 = vshrl.u32 %v454, 16
    %v457 = vcvt.s32.f32 %v455
    %v458 = vcvt.s32.f32 %v456
    %459 = vadd.xlane.f32.xlu0 %v457
    %v460 = vpop.xlane.xlu0 %459
    %461 = vadd.xlane.f32.xlu0 %v458
    %v462 = vpop.xlane.xlu0 %461
    %v463 = vcvt.f32.s32 %v460
    %v464 = vcvt.f32.s32 %v462
    %v465 = vshll.u32 %v464, 16
    %v466 = vadd.s32 %v465, %v463
    %v467 = vsel %vm90, %v367, 0
    %v468 = vand.u32 %v467, 65535
    %v469 = vshrl.u32 %v467, 16
    %v470 = vcvt.s32.f32 %v468
    %v471 = vcvt.s32.f32 %v469
    %472 = vadd.xlane.f32.xlu0 %v470
    %v473 = vpop.xlane.xlu0 %472
    %474 = vadd.xlane.f32.xlu0 %v471
    %v475 = vpop.xlane.xlu0 %474
    %v476 = vcvt.f32.s32 %v473
    %v477 = vcvt.f32.s32 %v475
    %v478 = vshll.u32 %v477, 16
    %v479 = vadd.s32 %v478, %v476
    %v480 = vsel %vm90, %v368, 0
    %v481 = vand.u32 %v480, 65535
    %v482 = vshrl.u32 %v480, 16
    %v483 = vcvt.s32.f32 %v481
    %v484 = vcvt.s32.f32 %v482
    %485 = vadd.xlane.f32.xlu0 %v483
    %v486 = vpop.xlane.xlu0 %485
    %487 = vadd.xlane.f32.xlu0 %v484
    %v488 = vpop.xlane.xlu0 %487
    %v489 = vcvt.f32.s32 %v486
    %v490 = vcvt.f32.s32 %v488
    %v491 = vshll.u32 %v490, 16
    %v492 = vadd.s32 %v491, %v489
    %v493 = vsel %vm90, %v369, 0
    %v494 = vand.u32 %v493, 65535
    %v495 = vshrl.u32 %v493, 16
    %v496 = vcvt.s32.f32 %v494
    %v497 = vcvt.s32.f32 %v495
    %498 = vadd.xlane.f32.xlu0 %v496
    %v499 = vpop.xlane.xlu0 %498
    %500 = vadd.xlane.f32.xlu0 %v497
    %v501 = vpop.xlane.xlu0 %500
    %v502 = vcvt.f32.s32 %v499
    %v503 = vcvt.f32.s32 %v501
    %v504 = vshll.u32 %v503, 16
    %v505 = vadd.s32 %v504, %v502
    %v506 = vsel %vm90, %v370, 0
    %v507 = vand.u32 %v506, 65535
    %v508 = vshrl.u32 %v506, 16
    %v509 = vcvt.s32.f32 %v507
    %v510 = vcvt.s32.f32 %v508
    %511 = vadd.xlane.f32.xlu0 %v509
    %v512 = vpop.xlane.xlu0 %511
    %513 = vadd.xlane.f32.xlu0 %v510
    %v514 = vpop.xlane.xlu0 %513
    %v515 = vcvt.f32.s32 %v512
    %v516 = vcvt.f32.s32 %v514
    %v517 = vshll.u32 %v516, 16
    %v518 = vadd.s32 %v517, %v515
    %v519 = vsel %vm90, %v371, 0
    %v520 = vand.u32 %v519, 65535
    %v521 = vshrl.u32 %v519, 16
    %v522 = vcvt.s32.f32 %v520
    %v523 = vcvt.s32.f32 %v521
    %524 = vadd.xlane.f32.xlu0 %v522
    %v525 = vpop.xlane.xlu0 %524
    %526 = vadd.xlane.f32.xlu0 %v523
    %v527 = vpop.xlane.xlu0 %526
    %v528 = vcvt.f32.s32 %v525
    %v529 = vcvt.f32.s32 %v527
    %v530 = vshll.u32 %v529, 16
    %v531 = vadd.s32 %v530, %v528
    %v532 = vsel %vm90, %v372, 0
    %v533 = vand.u32 %v532, 65535
    %v534 = vshrl.u32 %v532, 16
    %v535 = vcvt.s32.f32 %v533
    %v536 = vcvt.s32.f32 %v534
    %537 = vadd.xlane.f32.xlu0 %v535
    %v538 = vpop.xlane.xlu0 %537
    %539 = vadd.xlane.f32.xlu0 %v536
    %v540 = vpop.xlane.xlu0 %539
    %v541 = vcvt.f32.s32 %v538
    %v542 = vcvt.f32.s32 %v540
    %v543 = vshll.u32 %v542, 16
    %v544 = vadd.s32 %v543, %v541
    %v545 = vsel %vm90, %v373, 0
    %v546 = vand.u32 %v545, 65535
    %v547 = vshrl.u32 %v545, 16
    %v548 = vcvt.s32.f32 %v546
    %v549 = vcvt.s32.f32 %v547
    %550 = vadd.xlane.f32.xlu0 %v548
    %v551 = vpop.xlane.xlu0 %550
    %552 = vadd.xlane.f32.xlu0 %v549
    %v553 = vpop.xlane.xlu0 %552
    %v554 = vcvt.f32.s32 %v551
    %v555 = vcvt.f32.s32 %v553
    %v556 = vshll.u32 %v555, 16
    %v557 = vadd.s32 %v556, %v554
    %v558 = vsel %vm90, %v374, 0
    %v559 = vand.u32 %v558, 65535
    %v560 = vshrl.u32 %v558, 16
    %v561 = vcvt.s32.f32 %v559
    %v562 = vcvt.s32.f32 %v560
    %563 = vadd.xlane.f32.xlu0 %v561
    %v564 = vpop.xlane.xlu0 %563
    %565 = vadd.xlane.f32.xlu0 %v562
    %v566 = vpop.xlane.xlu0 %565
    %v567 = vcvt.f32.s32 %v564
    %v568 = vcvt.f32.s32 %v566
    %v569 = vshll.u32 %v568, 16
    %v570 = vadd.s32 %v569, %v567
    %v571 = vsel %vm90, %v375, 0
    %v572 = vand.u32 %v571, 65535
    %v573 = vshrl.u32 %v571, 16
    %v574 = vcvt.s32.f32 %v572
    %v575 = vcvt.s32.f32 %v573
    %576 = vadd.xlane.f32.xlu0 %v574
    %v577 = vpop.xlane.xlu0 %576
    %578 = vadd.xlane.f32.xlu0 %v575
    %v579 = vpop.xlane.xlu0 %578
    %v580 = vcvt.f32.s32 %v577
    %v581 = vcvt.f32.s32 %v579
    %v582 = vshll.u32 %v581, 16
    %v583 = vadd.s32 %v582, %v580
    %vm584 = vcmp.lt.s32.totalorder %v388, 8
    %vm585 = vcmp.lt.s32.totalorder %v401, 8
    %vm586 = vcmp.lt.s32.totalorder %v414, 8
    %vm587 = vcmp.lt.s32.totalorder %v427, 8
    %vm588 = vcmp.lt.s32.totalorder %v440, 8
    %vm589 = vcmp.lt.s32.totalorder %v453, 8
    %vm590 = vcmp.lt.s32.totalorder %v466, 8
    %vm591 = vcmp.lt.s32.totalorder %v479, 8
    %vm592 = vcmp.lt.s32.totalorder %v492, 8
    %vm593 = vcmp.lt.s32.totalorder %v505, 8
    %vm594 = vcmp.lt.s32.totalorder %v518, 8
    %vm595 = vcmp.lt.s32.totalorder %v531, 8
    %vm596 = vcmp.lt.s32.totalorder %v544, 8
    %vm597 = vcmp.lt.s32.totalorder %v557, 8
    %vm598 = vcmp.lt.s32.totalorder %v570, 8
    %vm599 = vcmp.lt.s32.totalorder %v583, 8
    %v600 = vsel %vm584, 1, 0
    %v601 = vsel %vm585, 1, 0
    %v602 = vsel %vm586, 1, 0
    %v603 = vsel %vm587, 1, 0
    %v604 = vsel %vm588, 1, 0
    %v605 = vsel %vm589, 1, 0
    %v606 = vsel %vm590, 1, 0
    %v607 = vsel %vm591, 1, 0
    %v608 = vsel %vm592, 1, 0
    %v609 = vsel %vm593, 1, 0
    %v610 = vsel %vm594, 1, 0
    %v611 = vsel %vm595, 1, 0
    %v612 = vsel %vm596, 1, 0
    %v613 = vsel %vm597, 1, 0
    %v614 = vsel %vm598, 1, 0
    %v615 = vsel %vm599, 1, 0
    %v616 = vcvt.s32.f32 %v600
    %v617 = vcvt.s32.f32 %v601
    %v618 = vcvt.s32.f32 %v602
    %v619 = vcvt.s32.f32 %v603
    %v620 = vcvt.s32.f32 %v604
    %v621 = vcvt.s32.f32 %v605
    %v622 = vcvt.s32.f32 %v606
    %v623 = vcvt.s32.f32 %v607
    %v624 = vcvt.s32.f32 %v608
    %v625 = vcvt.s32.f32 %v609
    %v626 = vcvt.s32.f32 %v610
    %v627 = vcvt.s32.f32 %v611
    %v628 = vcvt.s32.f32 %v612
    %v629 = vcvt.s32.f32 %v613
    %v630 = vcvt.s32.f32 %v614
    %v631 = vcvt.s32.f32 %v615
    %v648 = vperm.slane %v616, %v277
    %v649 = vadd.s32 %v277, 4294967288
    %v650 = vperm.slane %v617, %v649
    %vm651 = vcmask 130112
    %v652 = vsel %vm651, %v650, %v648
    %v653 = vperm.slane %v618, %v277
    %v654 = vperm.slane %v619, %v649
    %v655 = vsel %vm651, %v654, %v653
    %v656 = vperm.slane %v620, %v277
    %v657 = vperm.slane %v621, %v649
    %v658 = vsel %vm651, %v657, %v656
    %v659 = vperm.slane %v622, %v277
    %v660 = vperm.slane %v623, %v649
    %v661 = vsel %vm651, %v660, %v659
    %v662 = vperm.slane %v624, %v277
    %v663 = vperm.slane %v625, %v649
    %v664 = vsel %vm651, %v663, %v662
    %v665 = vperm.slane %v626, %v277
    %v666 = vperm.slane %v627, %v649
    %v667 = vsel %vm651, %v666, %v665
    %v668 = vperm.slane %v628, %v277
    %v669 = vperm.slane %v629, %v649
    %v670 = vsel %vm651, %v669, %v668
    %v671 = vperm.slane %v630, %v277
    %v672 = vperm.slane %v631, %v649
    %v673 = vsel %vm651, %v672, %v671
    %vm674 = vcmask 1041409
    %v675 = vsel %vm674, %v655, %v652
    %vm676 = vcmask 1042434
    %v677 = vsel %vm676, %v658, %v675
    %vm678 = vcmask 1043459
    %v679 = vsel %vm678, %v661, %v677
    %vm680 = vcmask 1044484
    %v681 = vsel %vm680, %v664, %v679
    %vm682 = vcmask 1045509
    %v683 = vsel %vm682, %v667, %v681
    %vm684 = vcmask 1046534
    %v685 = vsel %vm684, %v670, %v683
    %vm686 = vcmask 1047559
    %v687 = vsel %vm686, %v673, %v685
    %v689 = vmul.f32 %v160, %v687
    %690 = vst.msk [vmem:[#allocation10] sm:$0xff] %vm90, %v689
    // Predicated region
    $region42: #{tpu_custom_call.1} parent=1 // pred_check
      _
    $region43: #{tpu_custom_call.1} parent=1 // pred_check_branch
      %692 = sbr.rel (0) target = $region45
    $region44: #{tpu_custom_call.1} parent=1 // pred_region
      %694 = vsyncadd [#allocation4], 0
      %s696 = sshll.u32 [#allocation10], 4
      %s697 = int_to_ptr.vmem [resolvable:$true] %s696
      %s698 = sshll.u32 %s6, 4
      %s699 = int_to_ptr.hbm [resolvable:$true] %s698
      %701 = dma.vmem_to_hbm [thread:$0]  %s697, 128, %s699, [#allocation4]
    $region45: #{tpu_custom_call.1} parent=1 // pred_fallthru
      _
    // Predicated region
    $region46: #{tpu_custom_call.1} parent=1 // pred_check
      _
    $region47: #{tpu_custom_call.1} parent=1 // pred_check_branch
      %703 = sbr.rel (0) target = $region49
    $region48: #{tpu_custom_call.1} parent=1 // pred_region
      %705 = dma.done [#allocation4], 128
    $region49: #{tpu_custom_call.1} parent=1 // pred_fallthru
      _
    %706 = vsyncpa [#allocation3], 1
    %707 = vsyncpa [#allocation6], 1
    %708 = vsyncpa [#allocation9], 1
    %709 = vsyncpa [#allocation4], 1

</llo_original>
